<compile_context>
chip_gen: v7x
topology: tpu7x:2x2x1
jax: 0.10.0
libtpu: 0.0.40
codegen_flags: <defaults>
</compile_context>

<pallas_src>
import functools

import jax
import jax.numpy as jnp
from jax.experimental import pallas as pl
from jax.experimental.pallas import tpu as pltpu


# ------------------------------------------------------------------ kernels ----
def _fc_kernel_direct(x_ref, w_ref, b_ref, o_ref, *, compute_dtype=None):
    """f32-output variant: accumulate straight into the VMEM-resident output tile.

    The output BlockSpec index_map ignores k, so the tile stays in VMEM across the
    whole reduction; no scratch accumulator / extra copy needed.
    """
    k = pl.program_id(2)

    @pl.when(k == 0)
    def _():
        # Fold bias into the accumulator init (drops a separate VPU add at finalize).
        o_ref[...] = jnp.broadcast_to(b_ref[...].astype(o_ref.dtype), o_ref.shape)

    xv, wv = x_ref[...], w_ref[...]
    if compute_dtype is not None:
        xv = xv.astype(compute_dtype)
        wv = wv.astype(compute_dtype)
    o_ref[...] += jnp.dot(xv, wv, preferred_element_type=jnp.float32)


def _fc_kernel_scratch(x_ref, w_ref, b_ref, o_ref, acc_ref, *, compute_dtype=None):
    """Narrow-output variant: f32 scratch accumulator, single cast at the last k."""
    k = pl.program_id(2)

    @pl.when(k == 0)
    def _():
        acc_ref[...] = jnp.broadcast_to(b_ref[...].astype(jnp.float32), acc_ref.shape)

    xv, wv = x_ref[...], w_ref[...]
    if compute_dtype is not None:
        xv = xv.astype(compute_dtype)
        wv = wv.astype(compute_dtype)
    acc_ref[...] += jnp.dot(xv, wv, preferred_element_type=jnp.float32)

    @pl.when(k == pl.num_programs(2) - 1)
    def _():
        o_ref[...] = acc_ref[...].astype(o_ref.dtype)


# -------------------------------------------------------------- tile helpers ----
def _round_up(v, m):
    return ((v + m - 1) // m) * m


def _cdiv(a, b):
    return (a + b - 1) // b


def _balanced_tile(dim, preferred, align):
    """Smallest aligned tile covering `dim` in ceil(dim/preferred) steps.

    Guarantees the padded extent never exceeds dim by more than ~one alignment
    quantum per step (vs. a whole tile with naive round-up)."""
    steps = max(1, _cdiv(dim, preferred))
    return _round_up(_cdiv(dim, steps), align)


def _sublane_align(dtype):
    # 8 for f32, 16 for bf16, 32 for int8/fp8: keeps packed loads/stores unmasked.
    return max(8, 32 // jnp.dtype(dtype).itemsize)


# Generation-aware defaults (tm, tn, tk, vmem_limit_bytes).
_GEN_DEFAULTS = {
    # v6e: 128 MiB VMEM, f32 roofline crossover above 512-wide tiles -> go big.
    "v6": dict(tm=1024, tn=1024, tk=1024, vmem=64 << 20),
    # v5e: 512/512 already compute-bound for f32; keep modest tiles.
    "v5": dict(tm=512, tn=512, tk=1024, vmem=48 << 20),
    # v7x: only 64 MiB VMEM per TC -> keep footprint well under ~48 MiB.
    "v7": dict(tm=512, tn=512, tk=1024, vmem=40 << 20),
    None: dict(tm=512, tn=512, tk=1024, vmem=48 << 20),
}


def _device_generation():
    try:
        kind = jax.devices()[0].device_kind.lower()
    except Exception:  # pragma: no cover - defensive
        return None
    if "v7" in kind or "7x" in kind:
        return "v7"
    if "v6" in kind:
        return "v6"
    if "v5" in kind:
        return "v5"
    return None


# ------------------------------------------------------------------ forward ----
@functools.partial(
    jax.jit,
    static_argnames=("tm", "tn", "tk", "vmem_limit", "multicore", "compute_dtype"),
)
def _fc_forward(x, w, b, *, tm, tn, tk, vmem_limit, multicore, compute_dtype):
    M, K = x.shape
    K2, N = w.shape
    assert K == K2 and b.shape == (N,)

    sub = _sublane_align(x.dtype)
    tm_ = _balanced_tile(M, tm, sub)     # sublane dim
    tn_ = _balanced_tile(N, tn, 128)     # lane dim
    tk_ = _balanced_tile(K, tk, 128)     # lane dim (of x) / sublane dim (of w)

    # v7x: make sure both TensorCores get parallel grid work for small shapes.
    if multicore and _cdiv(M, tm_) * _cdiv(N, tn_) < 2:
        if N >= 2 * 128:
            tn_ = _round_up(_cdiv(N, 2), 128)
        elif M >= 2 * sub:
            tm_ = _round_up(_cdiv(M, 2), sub)

    Mp, Np, Kp = _round_up(M, tm_), _round_up(N, tn_), _round_up(K, tk_)

    # Pad only when actually needed (static check -> no-op ops for aligned shapes).
    # Zero K-padding contributes nothing to the dot; extra M/N rows/cols sliced off.
    xp = x if (Mp == M and Kp == K) else jnp.pad(x, ((0, Mp - M), (0, Kp - K)))
    wp = w if (Kp == K and Np == N) else jnp.pad(w, ((0, Kp - K), (0, Np - N)))
    bp = (b if Np == N else jnp.pad(b, (0, Np - N))).reshape(1, Np)

    grid = (Mp // tm_, Np // tn_, Kp // tk_)

    out_dtype = x.dtype
    direct = jnp.dtype(out_dtype) == jnp.dtype(jnp.float32)
    if direct:
        kernel = functools.partial(_fc_kernel_direct, compute_dtype=compute_dtype)
        scratch_shapes = []
    else:
        kernel = functools.partial(_fc_kernel_scratch, compute_dtype=compute_dtype)
        scratch_shapes = [pltpu.VMEM((tm_, tn_), jnp.float32)]

    itemsize = jnp.dtype(x.dtype).itemsize
    cost = pl.CostEstimate(
        flops=2 * Mp * Np * Kp,
        transcendentals=0,
        bytes_accessed=(Mp * Kp * grid[1] + Kp * Np * grid[0]) * itemsize
        + Mp * Np * jnp.dtype(out_dtype).itemsize
        + Np * 4,
    )

    out = pl.pallas_call(
        kernel,
        out_shape=jax.ShapeDtypeStruct((Mp, Np), out_dtype),
        grid_spec=pltpu.PrefetchScalarGridSpec(
            num_scalar_prefetch=0,
            grid=grid,
            in_specs=[
                pl.BlockSpec((tm_, tk_), lambda i, j, k: (i, k)),  # x tile
                pl.BlockSpec((tk_, tn_), lambda i, j, k: (k, j)),  # w tile
                pl.BlockSpec((1, tn_), lambda i, j, k: (0, j)),    # bias row
            ],
            out_specs=pl.BlockSpec((tm_, tn_), lambda i, j, k: (i, j)),
            scratch_shapes=scratch_shapes,
        ),
        compiler_params=pltpu.CompilerParams(
            dimension_semantics=("parallel", "parallel", "arbitrary"),
            vmem_limit_bytes=vmem_limit,
        ),
        cost_estimate=cost,
    )(xp, wp, bp)

    if Mp != M or Np != N:
        out = out[:M, :N]
    return out


def fc_layer_notexp(x, w, b, *, tm=None, tn=None, tk=None, compute_dtype=None):
    """y = x @ w + b (FCLayer_notexp.forward) via a tiled MXU matmul, f32 accumulation.

    Set compute_dtype=jnp.bfloat16 for the faster bf16 MXU path (f32 accumulation kept).
    """
    gen = _device_generation()
    d = _GEN_DEFAULTS.get(gen, _GEN_DEFAULTS[None])
    return _fc_forward(
        x, w, b,
        tm=d["tm"] if tm is None else tm,
        tn=d["tn"] if tn is None else tn,
        tk=d["tk"] if tk is None else tk,
        vmem_limit=d["vmem"],
        multicore=(gen == "v7"),
        compute_dtype=compute_dtype,
    )


# ------------- deterministic parameter init (mirrors the PyTorch __init__) -----
def xavier_uniform(key, in_features, out_features, dtype=jnp.float32):
    # torch.nn.init.xavier_uniform_ on an (in, out) matrix: U(-a, a), a = sqrt(6/(fan_in+fan_out))
    a = (6.0 / (in_features + out_features)) ** 0.5
    return jax.random.uniform(
        key, (in_features, out_features), dtype=dtype, minval=-a, maxval=a
    )


def truncated_normal(key, shape, std=0.5, mean=0.0, dtype=jnp.float32):
    # Matches the module's truncated_normal_ intent: N(0,1) truncated to (-2, 2), * std + mean.
    t = jax.random.truncated_normal(key, -2.0, 2.0, shape, dtype=dtype)
    return t * std + mean


if __name__ == "__main__":
    # Small shapes consistent with the module's forward: (batch, in_features) @ (in, out) + (out,)
    batch, in_features, out_features = 8, 32, 32

    key = jax.random.PRNGKey(0)
    kx, kw, kb = jax.random.split(key, 3)

    x = jax.random.normal(kx, (batch, in_features), dtype=jnp.float32)
    w = xavier_uniform(kw, in_features, out_features)
    b = truncated_normal(kb, (out_features,), std=0.5)

    out = jax.block_until_ready(fc_layer_notexp(x, w, b))
    ref = jnp.dot(x, w, precision=jax.lax.Precision.HIGHEST) + b
    assert out.shape == (batch, out_features)
    assert jnp.allclose(out, ref, atol=1e-4, rtol=1e-4), "mismatch vs reference (small)"

    # Exercise the unaligned / multi-k-step reduction path (balanced tiles + pad/slice).
    x2 = jax.random.normal(kx, (200, 1300), dtype=jnp.float32)
    w2 = xavier_uniform(kw, 1300, 300)
    b2 = truncated_normal(kb, (300,), std=0.5)
    out2 = jax.block_until_ready(fc_layer_notexp(x2, w2, b2))
    ref2 = jnp.dot(x2, w2, precision=jax.lax.Precision.HIGHEST) + b2
    assert out2.shape == (200, 300)
    assert jnp.allclose(out2, ref2, atol=1e-3, rtol=1e-3), "mismatch vs reference (ragged)"

    print("KERNEL_OK")
</pallas_src>

<mosaic_0001>
module attributes {stable_mosaic.version = 11 : i64} {
  func.func @_fc_kernel_direct(%arg0: i32, %arg1: i32, %arg2: i32, %arg3: memref<8x128xf32, #tpu.memory_space<vmem>>, %arg4: memref<128x128xf32, #tpu.memory_space<vmem>>, %arg5: memref<1x128xf32, #tpu.memory_space<vmem>>, %arg6: memref<8x128xf32, #tpu.memory_space<vmem>>) attributes {dimension_semantics = [#tpu.dimension_semantics<parallel>, #tpu.dimension_semantics<parallel>, #tpu.dimension_semantics<arbitrary>], iteration_bounds = array<i64: 1, 1, 1>, scalar_prefetch = 0 : i64, scratch_operands = 0 : i64, tpu.core_type = #tpu.core_type<tc>, window_params = [{transform_indices = @transform_0, window_bounds = array<i64: 8, 128>}, {transform_indices = @transform_1, window_bounds = array<i64: 128, 128>}, {transform_indices = @transform_2, window_bounds = array<i64: 1, 128>}, {transform_indices = @transform_3, window_bounds = array<i64: 8, 128>}]} {
    %c0_i32 = arith.constant 0 : i32
    %0 = arith.cmpi eq, %arg2, %c0_i32 : i32
    %1 = arith.extui %0 : i1 to i32
    %c0_i32_0 = arith.constant 0 : i32
    %2 = arith.cmpi ne, %1, %c0_i32_0 : i32
    scf.if %2 {
      %c0_8 = arith.constant 0 : index
      %c0_9 = arith.constant 0 : index
      %9 = vector.load %arg5[%c0_8, %c0_9] : memref<1x128xf32, #tpu.memory_space<vmem>>, vector<1x128xf32>
      %10 = vector.shape_cast %9 : vector<1x128xf32> to vector<1x128xf32>
      %11 = vector.broadcast %10 : vector<1x128xf32> to vector<8x128xf32>
      %c0_10 = arith.constant 0 : index
      %c0_11 = arith.constant 0 : index
      %12 = vector.load %arg6[%c0_10, %c0_11] : memref<8x128xf32, #tpu.memory_space<vmem>>, vector<8x128xf32>
      tpu.vector_store %arg6[%c0_10, %c0_11], %11 {strides = array<i32>} : memref<8x128xf32, #tpu.memory_space<vmem>>, vector<8x128xf32>,
    } else {
    }
    %c0 = arith.constant 0 : index
    %c0_1 = arith.constant 0 : index
    %3 = vector.load %arg3[%c0, %c0_1] : memref<8x128xf32, #tpu.memory_space<vmem>>, vector<8x128xf32>
    %c0_2 = arith.constant 0 : index
    %c0_3 = arith.constant 0 : index
    %4 = vector.load %arg4[%c0_2, %c0_3] : memref<128x128xf32, #tpu.memory_space<vmem>>, vector<128x128xf32>
    %c0_4 = arith.constant 0 : index
    %c0_5 = arith.constant 0 : index
    %5 = vector.load %arg6[%c0_4, %c0_5] : memref<8x128xf32, #tpu.memory_space<vmem>>, vector<8x128xf32>
    %cst = arith.constant dense<0.000000e+00> : vector<8x128xf32>
    %6 = tpu.matmul %3, %4, %cst {dimension_numbers = #tpu.dot_dimension_numbers<[1], [0], [0], [1], [0, 0, 1, 1], [], []>} : vector<8x128xf32>, vector<128x128xf32>, vector<8x128xf32> -> vector<8x128xf32>
    %7 = arith.addf %5, %6 : vector<8x128xf32>
    %c0_6 = arith.constant 0 : index
    %c0_7 = arith.constant 0 : index
    %8 = vector.load %arg6[%c0_6, %c0_7] : memref<8x128xf32, #tpu.memory_space<vmem>>, vector<8x128xf32>
    tpu.vector_store %arg6[%c0_6, %c0_7], %7 {strides = array<i32>} : memref<8x128xf32, #tpu.memory_space<vmem>>, vector<8x128xf32>,
    return
  }
  func.func @transform_0(%arg0: i32, %arg1: i32, %arg2: i32) -> (i32, i32) {
    %c0_i32 = arith.constant 0 : i32
    return %arg0, %arg2 : i32, i32
  }
  func.func @transform_1(%arg0: i32, %arg1: i32, %arg2: i32) -> (i32, i32) {
    %c0_i32 = arith.constant 0 : i32
    return %arg2, %arg1 : i32, i32
  }
  func.func @transform_2(%arg0: i32, %arg1: i32, %arg2: i32) -> (i32, i32) {
    %c0_i32 = arith.constant 0 : i32
    %c0_i32_0 = arith.constant 0 : i32
    return %c0_i32, %arg1 : i32, i32
  }
  func.func @transform_3(%arg0: i32, %arg1: i32, %arg2: i32) -> (i32, i32) {
    %c0_i32 = arith.constant 0 : i32
    return %arg0, %arg1 : i32, i32
  }
}

</mosaic_0001>

<llo_original>
// kernel: _fc_forward.1
$region0: #{_fc_forward.1}
  #allocation0 [shape = 'u32[]', space=smem, size = 0x4, offset = 0x4, fixed_abs, tag = 'smem constant byte address 0x4 - core index']
  #allocation1 [shape = 'u32[144,128]{1,0:T(1,128)}', space=vmem, size = 0x12000, scoped, tag = 'internal scratch']
  %s0 = inlined_call_operand.vmem [shape: f32[8,128], index: 0, kind: input, shape index: {}]
  %s1 = inlined_call_operand.vmem [shape: f32[128,128], index: 1, kind: input, shape index: {}]
  %s2 = inlined_call_operand.vmem [shape: f32[1,128], index: 2, kind: input, shape index: {}]
  %s3 = inlined_call_operand.hbm [shape: f32[8,128], index: 3, kind: output, shape index: {}]
  %s4 = sld [smem:[#allocation0]]
  $region26: #{_fc_forward.1} parent=0
    _
  %s6 = ssub.s32 1, %s4
  %s7 = scalar_select 0, %s6, %s4
  $region1: #{_fc_forward.1} parent=0
    #allocation2 [shape = 'u8[4096]{0}', space=vmem, size = 0x1000, scoped, tag = 'output window, operand 0, single buffered']
    #allocation3 [shape = 's32[1]{0}', space=sflag, size = 0x4, scoped, tag = 'scoped memory for _fc_forward.1']
    %8 = vsyncpa [#allocation3], 0
    // Predicated region
    $region2: #{_fc_forward.1} parent=1 // pred_check
      _
    $region3: #{_fc_forward.1} parent=1 // pred_check_branch
      %10 = sbr.rel (0) target = $region5
    $region4: #{_fc_forward.1} parent=1 // pred_region
      _
    $region5: #{_fc_forward.1} parent=1 // pred_fallthru
      _
    // Predicated region
    $region6: #{_fc_forward.1} parent=1 // pred_check
      _
    $region7: #{_fc_forward.1} parent=1 // pred_check_branch
      %12 = sbr.rel (0) target = $region9
    $region8: #{_fc_forward.1} parent=1 // pred_region
      _
    $region9: #{_fc_forward.1} parent=1 // pred_fallthru
      _
    // Predicated region
    $region10: #{_fc_forward.1} parent=1 // pred_check
      _
    $region11: #{_fc_forward.1} parent=1 // pred_check_branch
      %14 = sbr.rel (0) target = $region13
    $region12: #{_fc_forward.1} parent=1 // pred_region
      _
    $region13: #{_fc_forward.1} parent=1 // pred_fallthru
      _
    %p15 = scmp.eq.s32.totalorder 0, 0
    // Predicated region
    $region14: #{_fc_forward.1} parent=1 // pred_check
      %p16 = pneg %p15
    $region15: #{_fc_forward.1} parent=1 // pred_check_branch
      %18 = sbr.rel (%p16) target = $region17
    $region16: #{_fc_forward.1} parent=1 // pred_region
      %v19 = vld [vmem:[%s2] sm:$0x1]
      %v21 = vlaneseq
      %v22 = vshrl.u32 %v21, 7
      %v23 = vsub.s32 0, %v22
      %v24 = vrot.slane %v19, %v23
      %26 = vst [vmem:[#allocation2] sm:$0xff] %v24
    $region17: #{_fc_forward.1} parent=1 // pred_fallthru
      _
    %v27 = vld [vmem:[%s0] sm:$0xff]
    %v28 = vld [vmem:[%s1] sm:$0xff]
    %v29 = vld [vmem:[%s1 + $0x8] sm:$0xff]
    %v30 = vld [vmem:[%s1 + $0x10] sm:$0xff]
    %v31 = vld [vmem:[%s1 + $0x18] sm:$0xff]
    %v32 = vld [vmem:[%s1 + $0x20] sm:$0xff]
    %v33 = vld [vmem:[%s1 + $0x28] sm:$0xff]
    %v34 = vld [vmem:[%s1 + $0x30] sm:$0xff]
    %v35 = vld [vmem:[%s1 + $0x38] sm:$0xff]
    %v36 = vld [vmem:[%s1 + $0x40] sm:$0xff]
    %v37 = vld [vmem:[%s1 + $0x48] sm:$0xff]
    %v38 = vld [vmem:[%s1 + $0x50] sm:$0xff]
    %v39 = vld [vmem:[%s1 + $0x58] sm:$0xff]
    %v40 = vld [vmem:[%s1 + $0x60] sm:$0xff]
    %v41 = vld [vmem:[%s1 + $0x68] sm:$0xff]
    %v42 = vld [vmem:[%s1 + $0x70] sm:$0xff]
    %v43 = vld [vmem:[%s1 + $0x78] sm:$0xff]
    %v44 = vld [vmem:[#allocation2] sm:$0xff]
    %45 = vmatprep.subr.mxu0 0.0
    %46 = vmatpush1.msra.mxu0 %v28
    %47 = vmatprep.subr.mxu0 0.0
    %48 = vmatpush1.msra.mxu0 %v29
    %49 = vmatprep.subr.mxu0 0.0
    %50 = vmatpush1.msra.mxu0 %v30
    %51 = vmatprep.subr.mxu0 0.0
    %52 = vmatpush1.msra.mxu0 %v31
    %53 = vmatprep.subr.mxu0 0.0
    %54 = vmatpush1.msra.mxu0 %v32
    %55 = vmatprep.subr.mxu0 0.0
    %56 = vmatpush1.msra.mxu0 %v33
    %57 = vmatprep.subr.mxu0 0.0
    %58 = vmatpush1.msra.mxu0 %v34
    %59 = vmatprep.subr.mxu0 0.0
    %60 = vmatpush1.msra.mxu0 %v35
    %61 = vmatprep.subr.mxu0 0.0
    %62 = vmatpush1.msra.mxu0 %v36
    %63 = vmatprep.subr.mxu0 0.0
    %64 = vmatpush1.msra.mxu0 %v37
    %65 = vmatprep.subr.mxu0 0.0
    %66 = vmatpush1.msra.mxu0 %v38
    %67 = vmatprep.subr.mxu0 0.0
    %68 = vmatpush1.msra.mxu0 %v39
    %69 = vmatprep.subr.mxu0 0.0
    %70 = vmatpush1.msra.mxu0 %v40
    %71 = vmatprep.subr.mxu0 0.0
    %72 = vmatpush1.msra.mxu0 %v41
    %73 = vmatprep.subr.mxu0 0.0
    %74 = vmatpush1.msra.mxu0 %v42
    %75 = vmatprep.subr.mxu0 0.0
    %76 = vmatpush1.msra.mxu0 %v43
    %77 = vmatprep.subr.mxu0 0.0
    %78 = vmatpush1.msra.mxu0 0.0
    %79 = vmatprep.subr.mxu0 0.0
    %80 = vmatpush1.msra.mxu0 0.0
    %81 = vmatprep.subr.mxu0 0.0
    %82 = vmatpush1.msra.mxu0 0.0
    %83 = vmatprep.subr.mxu0 0.0
    %84 = vmatpush1.msra.mxu0 0.0
    %85 = vmatprep.subr.mxu0 0.0
    %86 = vmatpush1.msra.mxu0 0.0
    %87 = vmatprep.subr.mxu0 0.0
    %88 = vmatpush1.msra.mxu0 0.0
    %89 = vmatprep.subr.mxu0 0.0
    %90 = vmatpush1.msra.mxu0 0.0
    %91 = vmatprep.subr.mxu0 0.0
    %92 = vmatpush1.msra.mxu0 0.0
    %93 = vmatprep.subr.mxu0 0.0
    %94 = vmatpush1.msra.mxu0 0.0
    %95 = vmatprep.subr.mxu0 0.0
    %96 = vmatpush1.msra.mxu0 0.0
    %97 = vmatprep.subr.mxu0 0.0
    %98 = vmatpush1.msra.mxu0 0.0
    %99 = vmatprep.subr.mxu0 0.0
    %100 = vmatpush1.msra.mxu0 0.0
    %101 = vmatprep.subr.mxu0 0.0
    %102 = vmatpush1.msra.mxu0 0.0
    %103 = vmatprep.subr.mxu0 0.0
    %104 = vmatpush1.msra.mxu0 0.0
    %105 = vmatprep.subr.mxu0 0.0
    %106 = vmatpush1.msra.mxu0 0.0
    %107 = vmatprep.subr.mxu0 0.0
    %108 = vmatpush1.msra.mxu0 0.0
    %109 = vmatprep.mubr.f32.mxu0 0.0
    %110 = vmatmul.mubr.f32.gmra.mrb[0].mxu0 %v27
    %v111 = vpop.f32.mrb[0].mxu0
    %v112 = vadd.f32 0.0, %v111
    %v113 = vpop.f32.mrb[0].mxu0
    %114 = vdwg.mxu0
    %v115 = vadd.f32 %v44, %v112
    %116 = vst [vmem:[#allocation2] sm:$0xff] %v115
    // Predicated region
    $region18: #{_fc_forward.1} parent=1 // pred_check
      _
    $region19: #{_fc_forward.1} parent=1 // pred_check_branch
      %118 = sbr.rel (0) target = $region21
    $region20: #{_fc_forward.1} parent=1 // pred_region
      %s120 = ssub.s32 128, 128
      %121 = vsyncadd [#allocation3], %s120
      %s123 = sshll.u32 [#allocation2], 4
      %s124 = int_to_ptr.vmem [resolvable:$true] %s123
      %126 = dma.vmem_to_hbm [thread:$0]  %s124, 128, %s3, [#allocation3]
    $region21: #{_fc_forward.1} parent=1 // pred_fallthru
      _
    // Predicated region
    $region22: #{_fc_forward.1} parent=1 // pred_check
      _
    $region23: #{_fc_forward.1} parent=1 // pred_check_branch
      %128 = sbr.rel (0) target = $region25
    $region24: #{_fc_forward.1} parent=1 // pred_region
      %129 = dma.done [#allocation3], 128
    $region25: #{_fc_forward.1} parent=1 // pred_fallthru
      _
    %130 = vsyncpa [#allocation3], 1

</llo_original>
